<compile_context>
chip_gen: v7x
topology: tpu7x:2x2x1
jax: 0.10.0
libtpu: 0.0.40
codegen_flags: <defaults>
</compile_context>

<pallas_src>
import functools

import jax
import jax.numpy as jnp
from jax.experimental import pallas as pl
from jax.experimental.pallas import tpu as pltpu


def _round_up(x, m):
    return ((x + m - 1) // m) * m


def _sigmoid(x):
    # sigmoid(x) = 0.5 * tanh(0.5 x) + 0.5 : tanh goes to the (otherwise idle)
    # EUP slot and avoids the multi-op f32 divide expansion on the VALU.
    return 0.5 * jnp.tanh(0.5 * x) + 0.5


def multistage_kernel(x_ref, w_ref, out_ref, *, F, D, O, LANES):
    """Three fused MXU matmuls over a packed (block_b, LANES) activation.

    x_ref:   (block_b, LANES)  cols [0:F)=features_t1, [F:F+D)=drugs_t1,
                               col LANES-1 = 1.0 (bias lane), rest 0
    w_ref:   (LANES, LANES)    packed weight slab (see wrapper)
    out_ref: (block_b, LANES)  cols [0:F+D)        = f2 | d2
                               cols [F+D:2(F+D))   = f3 | d3
                               cols [2(F+D):+O)    = out
                               rest 0
    """
    x1 = x_ref[...]
    w = w_ref[...]
    FD = F + D

    # (1, LANES) masks; jnp.where broadcasts them over the batch sublanes.
    col = jax.lax.broadcasted_iota(jnp.int32, (1, LANES), 1)
    # drug columns of BOTH lane-copies get sigmoided between stages
    sig_mask = ((col >= F) & (col < FD)) | ((col >= FD + F) & (col < 2 * FD))

    def stage(x):
        return jnp.dot(x, w, preferred_element_type=jnp.float32)

    # stage 1: cols [0:FD) and [FD:2FD) both hold f2 | d2(pre-sigmoid)
    y1 = stage(x1)
    x2 = jnp.where(sig_mask, _sigmoid(y1), y1)

    # stage 2: cols [0:FD) and [FD:2FD) both hold f3 | d3(pre-sigmoid);
    #          col 2FD holds the (unused) stage-2 output head.
    y2 = stage(x2)
    x3 = jnp.where(sig_mask, _sigmoid(y2), y2)

    # stage 3: col 2FD = Wo . [f3, d3] + bo  (the real output head).
    y3 = stage(x3)

    # Single lane-dense 128-wide store: f2|d2 from x2, f3|d3 from the shifted
    # lane-copy of x3, sigmoid(output) at col 2FD, zeros elsewhere.
    out_ref[...] = jnp.where(
        col < FD, x2,
        jnp.where(col < 2 * FD, x3,
                  jnp.where(col < 2 * FD + O, _sigmoid(y3), 0.0)))


def multistage_forward(features_t1, drugs_t1, params):
    """params: Wf (F+D,F), bf (F,), Wd (F+D,D), bd (D,), Wo (F+D,O), bo (O,)."""
    B, F = features_t1.shape
    _, D = drugs_t1.shape
    O = params["Wo"].shape[1]
    LANES = 128
    FD = F + D
    R = LANES - 1  # bias / ones lane
    assert 2 * FD + O <= R, "packed lane layout exceeds one 128-lane slab"

    f32 = jnp.float32

    # ---- host-side packing (done once, outside the kernel) ----------------
    # Activation slab via a single fused concatenate: [feat | drug | 0 | 1].
    block_b = min(1024, _round_up(B, 8))
    B_pad = _round_up(B, block_b)
    x = jnp.concatenate([
        features_t1.astype(f32),
        drugs_t1.astype(f32),
        jnp.zeros((B, LANES - FD - 1), f32),
        jnp.ones((B, 1), f32),
    ], axis=1)
    if B_pad != B:
        x = jnp.concatenate([x, jnp.zeros((B_pad - B, LANES), f32)], axis=0)

    # Weight slab: two lane-copies of [Wf|Wd], Wo wired to the second copy's
    # rows, biases folded into row R, ones-lane self-propagation W[R,R]=1.
    Wf = params["Wf"].astype(f32)
    Wd = params["Wd"].astype(f32)
    Wo = params["Wo"].astype(f32)
    w_all = jnp.zeros((LANES, LANES), f32)
    w_all = w_all.at[:FD, 0:F].set(Wf)
    w_all = w_all.at[:FD, F:FD].set(Wd)
    w_all = w_all.at[:FD, FD:FD + F].set(Wf)          # shifted copy -> f3|d3 lanes
    w_all = w_all.at[:FD, FD + F:2 * FD].set(Wd)
    w_all = w_all.at[FD:2 * FD, 2 * FD:2 * FD + O].set(Wo)   # output head reads shifted copy
    w_all = w_all.at[R, 0:F].set(params["bf"].astype(f32))
    w_all = w_all.at[R, F:FD].set(params["bd"].astype(f32))
    w_all = w_all.at[R, FD:FD + F].set(params["bf"].astype(f32))
    w_all = w_all.at[R, FD + F:2 * FD].set(params["bd"].astype(f32))
    w_all = w_all.at[R, 2 * FD:2 * FD + O].set(params["bo"].astype(f32))
    w_all = w_all.at[R, R].set(1.0)

    # ---- pallas call -------------------------------------------------------
    grid = (B_pad // block_b,)
    kernel = functools.partial(multistage_kernel, F=F, D=D, O=O, LANES=LANES)

    slab = pl.pallas_call(
        kernel,
        out_shape=jax.ShapeDtypeStruct((B_pad, LANES), f32),
        grid=grid,
        in_specs=[
            pl.BlockSpec((block_b, LANES), lambda i: (i, 0)),
            pl.BlockSpec((LANES, LANES), lambda i: (0, 0)),
        ],
        out_specs=pl.BlockSpec((block_b, LANES), lambda i: (i, 0)),
        compiler_params=pltpu.CompilerParams(
            dimension_semantics=("parallel",),
            vmem_limit_bytes=32 * 1024 * 1024),
    )(x, w_all)

    # ---- unpack the lane-dense output slab ---------------------------------
    f2 = slab[:B, 0:F]
    d2 = slab[:B, F:FD]
    f3 = slab[:B, FD:FD + F]
    d3 = slab[:B, FD + F:2 * FD]
    out = slab[:B, 2 * FD:2 * FD + O]
    return f2, d2, f3, d3, out


def _reference(features_t1, drugs_t1, params):
    hp = jax.lax.Precision.HIGHEST

    def lin(x, W, b):
        return jnp.dot(x, W, precision=hp) + b

    X = jnp.concatenate([features_t1, drugs_t1], axis=1)
    f2 = lin(X, params["Wf"], params["bf"])
    d2 = jax.nn.sigmoid(lin(X, params["Wd"], params["bd"]))
    X = jnp.concatenate([f2, d2], axis=1)
    f3 = lin(X, params["Wf"], params["bf"])
    d3 = jax.nn.sigmoid(lin(X, params["Wd"], params["bd"]))
    X = jnp.concatenate([f3, d3], axis=1)
    out = jax.nn.sigmoid(lin(X, params["Wo"], params["bo"]))
    return f2, d2, f3, d3, out


if __name__ == "__main__":
    B, F, D, O = 8, 32, 16, 1

    key = jax.random.PRNGKey(0)
    keys = jax.random.split(key, 8)

    features_t1 = jax.random.normal(keys[0], (B, F), dtype=jnp.float32)
    drugs_t1 = jax.random.uniform(keys[1], (B, D), dtype=jnp.float32)

    scale = 1.0 / jnp.sqrt(jnp.float32(F + D))
    params = {
        "Wf": jax.random.normal(keys[2], (F + D, F), dtype=jnp.float32) * scale,
        "bf": jax.random.normal(keys[3], (F,), dtype=jnp.float32) * 0.1,
        "Wd": jax.random.normal(keys[4], (F + D, D), dtype=jnp.float32) * scale,
        "bd": jax.random.normal(keys[5], (D,), dtype=jnp.float32) * 0.1,
        "Wo": jax.random.normal(keys[6], (F + D, O), dtype=jnp.float32) * scale,
        "bo": jax.random.normal(keys[7], (O,), dtype=jnp.float32) * 0.1,
    }

    outs = multistage_forward(features_t1, drugs_t1, params)
    outs = jax.block_until_ready(outs)

    refs = _reference(features_t1, drugs_t1, params)
    for name, o, r in zip(("f2", "d2", "f3", "d3", "out"), outs, refs):
        assert o.shape == r.shape, (name, o.shape, r.shape)
        err = float(jnp.max(jnp.abs(o - r)))
        assert err < 1e-3, (name, err)

    print("KERNEL_OK")
</pallas_src>

<mosaic_0001>
module attributes {stable_mosaic.version = 11 : i64} {
  func.func @multistage_kernel(%arg0: i32, %arg1: memref<8x128xf32, #tpu.memory_space<vmem>>, %arg2: memref<128x128xf32, #tpu.memory_space<vmem>>, %arg3: memref<8x128xf32, #tpu.memory_space<vmem>>) attributes {dimension_semantics = [#tpu.dimension_semantics<parallel>], iteration_bounds = array<i64: 1>, scalar_prefetch = 0 : i64, scratch_operands = 0 : i64, tpu.core_type = #tpu.core_type<tc>, window_params = [{transform_indices = @transform_0, window_bounds = array<i64: 8, 128>}, {pipeline_mode = #tpu.pipeline_mode<synchronous>, transform_indices = @transform_1, window_bounds = array<i64: 128, 128>}, {transform_indices = @transform_2, window_bounds = array<i64: 8, 128>}]} {
    %c0 = arith.constant 0 : index
    %c0_0 = arith.constant 0 : index
    %0 = vector.load %arg1[%c0, %c0_0] : memref<8x128xf32, #tpu.memory_space<vmem>>, vector<8x128xf32>
    %c0_1 = arith.constant 0 : index
    %c0_2 = arith.constant 0 : index
    %1 = vector.load %arg2[%c0_1, %c0_2] : memref<128x128xf32, #tpu.memory_space<vmem>>, vector<128x128xf32>
    %2 = tpu.iota {dimensions = array<i32: 1>} : vector<1x128xi32>
    %c32_i32 = arith.constant 32 : i32
    %3 = vector.broadcast %c32_i32 : i32 to vector<1x128xi32>
    %4 = arith.cmpi sge, %2, %3 : vector<1x128xi32>
    %c48_i32 = arith.constant 48 : i32
    %5 = vector.broadcast %c48_i32 : i32 to vector<1x128xi32>
    %6 = arith.cmpi slt, %2, %5 : vector<1x128xi32>
    %7 = arith.andi %4, %6 : vector<1x128xi1>
    %c80_i32 = arith.constant 80 : i32
    %8 = vector.broadcast %c80_i32 : i32 to vector<1x128xi32>
    %9 = arith.cmpi sge, %2, %8 : vector<1x128xi32>
    %c96_i32 = arith.constant 96 : i32
    %10 = vector.broadcast %c96_i32 : i32 to vector<1x128xi32>
    %11 = arith.cmpi slt, %2, %10 : vector<1x128xi32>
    %12 = arith.andi %9, %11 : vector<1x128xi1>
    %13 = arith.ori %7, %12 : vector<1x128xi1>
    %cst = arith.constant dense<0.000000e+00> : vector<8x128xf32>
    %14 = tpu.matmul %0, %1, %cst {dimension_numbers = #tpu.dot_dimension_numbers<[1], [0], [0], [1], [0, 0, 1, 1], [], []>} : vector<8x128xf32>, vector<128x128xf32>, vector<8x128xf32> -> vector<8x128xf32>
    %cst_3 = arith.constant 5.000000e-01 : f32
    %15 = vector.broadcast %cst_3 : f32 to vector<8x128xf32>
    %16 = arith.mulf %15, %14 : vector<8x128xf32>
    %17 = math.tanh %16 : vector<8x128xf32>
    %cst_4 = arith.constant 5.000000e-01 : f32
    %18 = vector.broadcast %cst_4 : f32 to vector<8x128xf32>
    %19 = arith.mulf %18, %17 : vector<8x128xf32>
    %cst_5 = arith.constant 5.000000e-01 : f32
    %20 = vector.broadcast %cst_5 : f32 to vector<8x128xf32>
    %21 = arith.addf %19, %20 : vector<8x128xf32>
    %22 = vector.shape_cast %13 : vector<1x128xi1> to vector<1x128xi1>
    %23 = vector.broadcast %22 : vector<1x128xi1> to vector<8x128xi1>
    %24 = arith.select %23, %21, %14 : vector<8x128xi1>, vector<8x128xf32>
    %cst_6 = arith.constant dense<0.000000e+00> : vector<8x128xf32>
    %25 = tpu.matmul %24, %1, %cst_6 {dimension_numbers = #tpu.dot_dimension_numbers<[1], [0], [0], [1], [0, 0, 1, 1], [], []>} : vector<8x128xf32>, vector<128x128xf32>, vector<8x128xf32> -> vector<8x128xf32>
    %cst_7 = arith.constant 5.000000e-01 : f32
    %26 = vector.broadcast %cst_7 : f32 to vector<8x128xf32>
    %27 = arith.mulf %26, %25 : vector<8x128xf32>
    %28 = math.tanh %27 : vector<8x128xf32>
    %cst_8 = arith.constant 5.000000e-01 : f32
    %29 = vector.broadcast %cst_8 : f32 to vector<8x128xf32>
    %30 = arith.mulf %29, %28 : vector<8x128xf32>
    %cst_9 = arith.constant 5.000000e-01 : f32
    %31 = vector.broadcast %cst_9 : f32 to vector<8x128xf32>
    %32 = arith.addf %30, %31 : vector<8x128xf32>
    %33 = vector.shape_cast %13 : vector<1x128xi1> to vector<1x128xi1>
    %34 = vector.broadcast %33 : vector<1x128xi1> to vector<8x128xi1>
    %35 = arith.select %34, %32, %25 : vector<8x128xi1>, vector<8x128xf32>
    %cst_10 = arith.constant dense<0.000000e+00> : vector<8x128xf32>
    %36 = tpu.matmul %35, %1, %cst_10 {dimension_numbers = #tpu.dot_dimension_numbers<[1], [0], [0], [1], [0, 0, 1, 1], [], []>} : vector<8x128xf32>, vector<128x128xf32>, vector<8x128xf32> -> vector<8x128xf32>
    %c48_i32_11 = arith.constant 48 : i32
    %37 = vector.broadcast %c48_i32_11 : i32 to vector<1x128xi32>
    %38 = arith.cmpi slt, %2, %37 : vector<1x128xi32>
    %c96_i32_12 = arith.constant 96 : i32
    %39 = vector.broadcast %c96_i32_12 : i32 to vector<1x128xi32>
    %40 = arith.cmpi slt, %2, %39 : vector<1x128xi32>
    %c97_i32 = arith.constant 97 : i32
    %41 = vector.broadcast %c97_i32 : i32 to vector<1x128xi32>
    %42 = arith.cmpi slt, %2, %41 : vector<1x128xi32>
    %cst_13 = arith.constant 5.000000e-01 : f32
    %43 = vector.broadcast %cst_13 : f32 to vector<8x128xf32>
    %44 = arith.mulf %43, %36 : vector<8x128xf32>
    %45 = math.tanh %44 : vector<8x128xf32>
    %cst_14 = arith.constant 5.000000e-01 : f32
    %46 = vector.broadcast %cst_14 : f32 to vector<8x128xf32>
    %47 = arith.mulf %46, %45 : vector<8x128xf32>
    %cst_15 = arith.constant 5.000000e-01 : f32
    %48 = vector.broadcast %cst_15 : f32 to vector<8x128xf32>
    %49 = arith.addf %47, %48 : vector<8x128xf32>
    %cst_16 = arith.constant 0.000000e+00 : f32
    %50 = vector.shape_cast %42 : vector<1x128xi1> to vector<1x128xi1>
    %51 = vector.broadcast %50 : vector<1x128xi1> to vector<8x128xi1>
    %52 = vector.broadcast %cst_16 : f32 to vector<8x128xf32>
    %53 = arith.select %51, %49, %52 : vector<8x128xi1>, vector<8x128xf32>
    %54 = vector.shape_cast %40 : vector<1x128xi1> to vector<1x128xi1>
    %55 = vector.broadcast %54 : vector<1x128xi1> to vector<8x128xi1>
    %56 = arith.select %55, %35, %53 : vector<8x128xi1>, vector<8x128xf32>
    %57 = vector.shape_cast %38 : vector<1x128xi1> to vector<1x128xi1>
    %58 = vector.broadcast %57 : vector<1x128xi1> to vector<8x128xi1>
    %59 = arith.select %58, %24, %56 : vector<8x128xi1>, vector<8x128xf32>
    %c0_17 = arith.constant 0 : index
    %c0_18 = arith.constant 0 : index
    %60 = vector.load %arg3[%c0_17, %c0_18] : memref<8x128xf32, #tpu.memory_space<vmem>>, vector<8x128xf32>
    tpu.vector_store %arg3[%c0_17, %c0_18], %59 {strides = array<i32>} : memref<8x128xf32, #tpu.memory_space<vmem>>, vector<8x128xf32>,
    return
  }
  func.func @transform_0(%arg0: i32) -> (i32, i32) {
    %c0_i32 = arith.constant 0 : i32
    %c0_i32_0 = arith.constant 0 : i32
    return %arg0, %c0_i32 : i32, i32
  }
  func.func @transform_1(%arg0: i32) -> (i32, i32) {
    %c0_i32 = arith.constant 0 : i32
    %c0_i32_0 = arith.constant 0 : i32
    %c0_i32_1 = arith.constant 0 : i32
    return %c0_i32, %c0_i32_0 : i32, i32
  }
  func.func @transform_2(%arg0: i32) -> (i32, i32) {
    %c0_i32 = arith.constant 0 : i32
    %c0_i32_0 = arith.constant 0 : i32
    return %arg0, %c0_i32 : i32, i32
  }
}

</mosaic_0001>

<llo_original>
// kernel: tpu_custom_call.1
$region0: #{tpu_custom_call.1}
  #allocation0 [shape = 'u32[]', space=smem, size = 0x4, offset = 0x4, fixed_abs, tag = 'smem constant byte address 0x4 - core index']
  #allocation1 [shape = 'u32[144,128]{1,0:T(1,128)}', space=vmem, size = 0x12000, scoped, tag = 'internal scratch']
  %s0 = inlined_call_operand.hbm [shape: f32[8,128], index: 0, kind: input, shape index: {}]
  %s1 = inlined_call_operand.hbm [shape: f32[128,128], index: 1, kind: input, shape index: {}]
  %s2 = inlined_call_operand.hbm [shape: f32[8,128], index: 2, kind: output, shape index: {}]
  %s3 = sld [smem:[#allocation0]]
  $region26: #{tpu_custom_call.1} parent=0
    _
  %s5 = ssub.s32 1, %s3
  %s6 = scalar_select 0, %s5, %s3
  $region1: #{tpu_custom_call.1} parent=0
    #allocation2 [shape = 'u8[4096]{0}', space=vmem, size = 0x1000, scoped, tag = 'input window, operand 0, single buffered']
    #allocation3 [shape = 's32[1]{0}', space=sflag, size = 0x4, scoped, tag = 'scoped memory for tpu_custom_call.1']
    #allocation4 [shape = 's32[1]{0}', space=sflag, size = 0x4, scoped, tag = 'scoped memory for tpu_custom_call.1']
    #allocation5 [shape = 'u8[65536]{0}', space=vmem, size = 0x10000, scoped, tag = 'input window, operand 1, single buffered']
    #allocation6 [shape = 's32[1]{0}', space=sflag, size = 0x4, scoped, tag = 'scoped memory for tpu_custom_call.1']
    #allocation7 [shape = 'u8[4096]{0}', space=vmem, size = 0x1000, scoped, tag = 'output window, operand 0, single buffered']
    %7 = vsyncpa [#allocation3], 0
    %8 = vsyncpa [#allocation6], 0
    %9 = vsyncpa [#allocation4], 0
    // Predicated region
    $region2: #{tpu_custom_call.1} parent=1 // pred_check
      _
    $region3: #{tpu_custom_call.1} parent=1 // pred_check_branch
      %11 = sbr.rel (0) target = $region5
    $region4: #{tpu_custom_call.1} parent=1 // pred_region
      %s13 = ssub.s32 128, 128
      %14 = vsyncadd [#allocation3], %s13
      %s16 = sshll.u32 [#allocation2], 4
      %s17 = int_to_ptr.vmem [resolvable:$true] %s16
      %19 = dma.hbm_to_vmem [thread:$0]  %s0, 128, %s17, [#allocation3]
    $region5: #{tpu_custom_call.1} parent=1 // pred_fallthru
      _
    // Predicated region
    $region6: #{tpu_custom_call.1} parent=1 // pred_check
      _
    $region7: #{tpu_custom_call.1} parent=1 // pred_check_branch
      %21 = sbr.rel (0) target = $region9
    $region8: #{tpu_custom_call.1} parent=1 // pred_region
      %s23 = ssub.s32 2048, 2048
      %24 = vsyncadd [#allocation6], %s23
      %s25 = sshll.u32 [#allocation5], 4
      %s26 = int_to_ptr.vmem [resolvable:$true] %s25
      %31 = dma.hbm_to_vmem [thread:$0]  %s1, 2048, %s26, [#allocation6], 128, 128, 8
    $region9: #{tpu_custom_call.1} parent=1 // pred_fallthru
      _
    // Predicated region
    $region10: #{tpu_custom_call.1} parent=1 // pred_check
      _
    $region11: #{tpu_custom_call.1} parent=1 // pred_check_branch
      %33 = sbr.rel (0) target = $region13
    $region12: #{tpu_custom_call.1} parent=1 // pred_region
      %34 = dma.done [#allocation3], 128
    $region13: #{tpu_custom_call.1} parent=1 // pred_fallthru
      _
    // Predicated region
    $region14: #{tpu_custom_call.1} parent=1 // pred_check
      _
    $region15: #{tpu_custom_call.1} parent=1 // pred_check_branch
      %36 = sbr.rel (0) target = $region17
    $region16: #{tpu_custom_call.1} parent=1 // pred_region
      %37 = dma.done [#allocation6], 2048
    $region17: #{tpu_custom_call.1} parent=1 // pred_fallthru
      _
    %v38 = vld [vmem:[#allocation2] sm:$0xff]
    %v39 = vld [vmem:[#allocation5] sm:$0xff]
    %v40 = vld [vmem:[#allocation5 + $0x8] sm:$0xff]
    %v41 = vld [vmem:[#allocation5 + $0x10] sm:$0xff]
    %v42 = vld [vmem:[#allocation5 + $0x18] sm:$0xff]
    %v43 = vld [vmem:[#allocation5 + $0x20] sm:$0xff]
    %v44 = vld [vmem:[#allocation5 + $0x28] sm:$0xff]
    %v45 = vld [vmem:[#allocation5 + $0x30] sm:$0xff]
    %v46 = vld [vmem:[#allocation5 + $0x38] sm:$0xff]
    %v47 = vld [vmem:[#allocation5 + $0x40] sm:$0xff]
    %v48 = vld [vmem:[#allocation5 + $0x48] sm:$0xff]
    %v49 = vld [vmem:[#allocation5 + $0x50] sm:$0xff]
    %v50 = vld [vmem:[#allocation5 + $0x58] sm:$0xff]
    %v51 = vld [vmem:[#allocation5 + $0x60] sm:$0xff]
    %v52 = vld [vmem:[#allocation5 + $0x68] sm:$0xff]
    %v53 = vld [vmem:[#allocation5 + $0x70] sm:$0xff]
    %v54 = vld [vmem:[#allocation5 + $0x78] sm:$0xff]
    %v55 = vlaneseq
    %v56 = vand.u32 %v55, 127
    %vm57 = vcmp.ge.s32.totalorder %v56, 32
    %vm58 = vcmp.lt.s32.totalorder %v56, 48
    %vm59 = vmand %vm57, %vm58
    %vm60 = vcmp.ge.s32.totalorder %v56, 80
    %vm61 = vcmp.lt.s32.totalorder %v56, 96
    %vm62 = vmand %vm60, %vm61
    %vm63 = vmor %vm59, %vm62
    %64 = vmatprep.subr.mxu0 0.0
    %65 = vmatpush1.msra.mxu0 %v39
    %66 = vmatprep.subr.mxu0 0.0
    %67 = vmatpush1.msra.mxu0 %v40
    %68 = vmatprep.subr.mxu0 0.0
    %69 = vmatpush1.msra.mxu0 %v41
    %70 = vmatprep.subr.mxu0 0.0
    %71 = vmatpush1.msra.mxu0 %v42
    %72 = vmatprep.subr.mxu0 0.0
    %73 = vmatpush1.msra.mxu0 %v43
    %74 = vmatprep.subr.mxu0 0.0
    %75 = vmatpush1.msra.mxu0 %v44
    %76 = vmatprep.subr.mxu0 0.0
    %77 = vmatpush1.msra.mxu0 %v45
    %78 = vmatprep.subr.mxu0 0.0
    %79 = vmatpush1.msra.mxu0 %v46
    %80 = vmatprep.subr.mxu0 0.0
    %81 = vmatpush1.msra.mxu0 %v47
    %82 = vmatprep.subr.mxu0 0.0
    %83 = vmatpush1.msra.mxu0 %v48
    %84 = vmatprep.subr.mxu0 0.0
    %85 = vmatpush1.msra.mxu0 %v49
    %86 = vmatprep.subr.mxu0 0.0
    %87 = vmatpush1.msra.mxu0 %v50
    %88 = vmatprep.subr.mxu0 0.0
    %89 = vmatpush1.msra.mxu0 %v51
    %90 = vmatprep.subr.mxu0 0.0
    %91 = vmatpush1.msra.mxu0 %v52
    %92 = vmatprep.subr.mxu0 0.0
    %93 = vmatpush1.msra.mxu0 %v53
    %94 = vmatprep.subr.mxu0 0.0
    %95 = vmatpush1.msra.mxu0 %v54
    %96 = vmatprep.subr.mxu0 0.0
    %97 = vmatpush1.msra.mxu0 0.0
    %98 = vmatprep.subr.mxu0 0.0
    %99 = vmatpush1.msra.mxu0 0.0
    %100 = vmatprep.subr.mxu0 0.0
    %101 = vmatpush1.msra.mxu0 0.0
    %102 = vmatprep.subr.mxu0 0.0
    %103 = vmatpush1.msra.mxu0 0.0
    %104 = vmatprep.subr.mxu0 0.0
    %105 = vmatpush1.msra.mxu0 0.0
    %106 = vmatprep.subr.mxu0 0.0
    %107 = vmatpush1.msra.mxu0 0.0
    %108 = vmatprep.subr.mxu0 0.0
    %109 = vmatpush1.msra.mxu0 0.0
    %110 = vmatprep.subr.mxu0 0.0
    %111 = vmatpush1.msra.mxu0 0.0
    %112 = vmatprep.subr.mxu0 0.0
    %113 = vmatpush1.msra.mxu0 0.0
    %114 = vmatprep.subr.mxu0 0.0
    %115 = vmatpush1.msra.mxu0 0.0
    %116 = vmatprep.subr.mxu0 0.0
    %117 = vmatpush1.msra.mxu0 0.0
    %118 = vmatprep.subr.mxu0 0.0
    %119 = vmatpush1.msra.mxu0 0.0
    %120 = vmatprep.subr.mxu0 0.0
    %121 = vmatpush1.msra.mxu0 0.0
    %122 = vmatprep.subr.mxu0 0.0
    %123 = vmatpush1.msra.mxu0 0.0
    %124 = vmatprep.subr.mxu0 0.0
    %125 = vmatpush1.msra.mxu0 0.0
    %126 = vmatprep.subr.mxu0 0.0
    %127 = vmatpush1.msra.mxu0 0.0
    %128 = vmatprep.mubr.f32.mxu0 0.0
    %129 = vmatmul.mubr.f32.gmra.mrb[0].mxu0 %v38
    %v130 = vpop.f32.mrb[0].mxu0
    %v131 = vadd.f32 0.0, %v130
    %v132 = vpop.f32.mrb[0].mxu0
    %133 = vdwg.mxu0
    %v134 = vmul.f32 %v131, 0.5
    %v135 = vtanh.pop %v134
    %v136 = vmul.f32 %v135, 0.5
    %v137 = vadd.f32 %v136, 0.5
    %v138 = vsel %vm63, 1, 0
    %vm139 = vcmp.eq.s32.totalorder %v138, 1
    %v140 = vsel %vm139, %v137, %v131
    %141 = vmatprep.subr.mxu0 0.0
    %142 = vmatpush1.msra.mxu0 %v39
    %143 = vmatprep.subr.mxu0 0.0
    %144 = vmatpush1.msra.mxu0 %v40
    %145 = vmatprep.subr.mxu0 0.0
    %146 = vmatpush1.msra.mxu0 %v41
    %147 = vmatprep.subr.mxu0 0.0
    %148 = vmatpush1.msra.mxu0 %v42
    %149 = vmatprep.subr.mxu0 0.0
    %150 = vmatpush1.msra.mxu0 %v43
    %151 = vmatprep.subr.mxu0 0.0
    %152 = vmatpush1.msra.mxu0 %v44
    %153 = vmatprep.subr.mxu0 0.0
    %154 = vmatpush1.msra.mxu0 %v45
    %155 = vmatprep.subr.mxu0 0.0
    %156 = vmatpush1.msra.mxu0 %v46
    %157 = vmatprep.subr.mxu0 0.0
    %158 = vmatpush1.msra.mxu0 %v47
    %159 = vmatprep.subr.mxu0 0.0
    %160 = vmatpush1.msra.mxu0 %v48
    %161 = vmatprep.subr.mxu0 0.0
    %162 = vmatpush1.msra.mxu0 %v49
    %163 = vmatprep.subr.mxu0 0.0
    %164 = vmatpush1.msra.mxu0 %v50
    %165 = vmatprep.subr.mxu0 0.0
    %166 = vmatpush1.msra.mxu0 %v51
    %167 = vmatprep.subr.mxu0 0.0
    %168 = vmatpush1.msra.mxu0 %v52
    %169 = vmatprep.subr.mxu0 0.0
    %170 = vmatpush1.msra.mxu0 %v53
    %171 = vmatprep.subr.mxu0 0.0
    %172 = vmatpush1.msra.mxu0 %v54
    %173 = vmatprep.subr.mxu0 0.0
    %174 = vmatpush1.msra.mxu0 0.0
    %175 = vmatprep.subr.mxu0 0.0
    %176 = vmatpush1.msra.mxu0 0.0
    %177 = vmatprep.subr.mxu0 0.0
    %178 = vmatpush1.msra.mxu0 0.0
    %179 = vmatprep.subr.mxu0 0.0
    %180 = vmatpush1.msra.mxu0 0.0
    %181 = vmatprep.subr.mxu0 0.0
    %182 = vmatpush1.msra.mxu0 0.0
    %183 = vmatprep.subr.mxu0 0.0
    %184 = vmatpush1.msra.mxu0 0.0
    %185 = vmatprep.subr.mxu0 0.0
    %186 = vmatpush1.msra.mxu0 0.0
    %187 = vmatprep.subr.mxu0 0.0
    %188 = vmatpush1.msra.mxu0 0.0
    %189 = vmatprep.subr.mxu0 0.0
    %190 = vmatpush1.msra.mxu0 0.0
    %191 = vmatprep.subr.mxu0 0.0
    %192 = vmatpush1.msra.mxu0 0.0
    %193 = vmatprep.subr.mxu0 0.0
    %194 = vmatpush1.msra.mxu0 0.0
    %195 = vmatprep.subr.mxu0 0.0
    %196 = vmatpush1.msra.mxu0 0.0
    %197 = vmatprep.subr.mxu0 0.0
    %198 = vmatpush1.msra.mxu0 0.0
    %199 = vmatprep.subr.mxu0 0.0
    %200 = vmatpush1.msra.mxu0 0.0
    %201 = vmatprep.subr.mxu0 0.0
    %202 = vmatpush1.msra.mxu0 0.0
    %203 = vmatprep.subr.mxu0 0.0
    %204 = vmatpush1.msra.mxu0 0.0
    %205 = vmatprep.mubr.f32.mxu0 0.0
    %206 = vmatmul.mubr.f32.gmra.mrb[0].mxu0 %v140
    %v207 = vpop.f32.mrb[0].mxu0
    %v208 = vadd.f32 0.0, %v207
    %v209 = vpop.f32.mrb[0].mxu0
    %210 = vdwg.mxu0
    %v211 = vmul.f32 %v208, 0.5
    %v212 = vtanh.pop %v211
    %v213 = vmul.f32 %v212, 0.5
    %v214 = vadd.f32 %v213, 0.5
    %v215 = vsel %vm139, %v214, %v208
    %216 = vmatprep.subr.mxu0 0.0
    %217 = vmatpush1.msra.mxu0 %v39
    %218 = vmatprep.subr.mxu0 0.0
    %219 = vmatpush1.msra.mxu0 %v40
    %220 = vmatprep.subr.mxu0 0.0
    %221 = vmatpush1.msra.mxu0 %v41
    %222 = vmatprep.subr.mxu0 0.0
    %223 = vmatpush1.msra.mxu0 %v42
    %224 = vmatprep.subr.mxu0 0.0
    %225 = vmatpush1.msra.mxu0 %v43
    %226 = vmatprep.subr.mxu0 0.0
    %227 = vmatpush1.msra.mxu0 %v44
    %228 = vmatprep.subr.mxu0 0.0
    %229 = vmatpush1.msra.mxu0 %v45
    %230 = vmatprep.subr.mxu0 0.0
    %231 = vmatpush1.msra.mxu0 %v46
    %232 = vmatprep.subr.mxu0 0.0
    %233 = vmatpush1.msra.mxu0 %v47
    %234 = vmatprep.subr.mxu0 0.0
    %235 = vmatpush1.msra.mxu0 %v48
    %236 = vmatprep.subr.mxu0 0.0
    %237 = vmatpush1.msra.mxu0 %v49
    %238 = vmatprep.subr.mxu0 0.0
    %239 = vmatpush1.msra.mxu0 %v50
    %240 = vmatprep.subr.mxu0 0.0
    %241 = vmatpush1.msra.mxu0 %v51
    %242 = vmatprep.subr.mxu0 0.0
    %243 = vmatpush1.msra.mxu0 %v52
    %244 = vmatprep.subr.mxu0 0.0
    %245 = vmatpush1.msra.mxu0 %v53
    %246 = vmatprep.subr.mxu0 0.0
    %247 = vmatpush1.msra.mxu0 %v54
    %248 = vmatprep.subr.mxu0 0.0
    %249 = vmatpush1.msra.mxu0 0.0
    %250 = vmatprep.subr.mxu0 0.0
    %251 = vmatpush1.msra.mxu0 0.0
    %252 = vmatprep.subr.mxu0 0.0
    %253 = vmatpush1.msra.mxu0 0.0
    %254 = vmatprep.subr.mxu0 0.0
    %255 = vmatpush1.msra.mxu0 0.0
    %256 = vmatprep.subr.mxu0 0.0
    %257 = vmatpush1.msra.mxu0 0.0
    %258 = vmatprep.subr.mxu0 0.0
    %259 = vmatpush1.msra.mxu0 0.0
    %260 = vmatprep.subr.mxu0 0.0
    %261 = vmatpush1.msra.mxu0 0.0
    %262 = vmatprep.subr.mxu0 0.0
    %263 = vmatpush1.msra.mxu0 0.0
    %264 = vmatprep.subr.mxu0 0.0
    %265 = vmatpush1.msra.mxu0 0.0
    %266 = vmatprep.subr.mxu0 0.0
    %267 = vmatpush1.msra.mxu0 0.0
    %268 = vmatprep.subr.mxu0 0.0
    %269 = vmatpush1.msra.mxu0 0.0
    %270 = vmatprep.subr.mxu0 0.0
    %271 = vmatpush1.msra.mxu0 0.0
    %272 = vmatprep.subr.mxu0 0.0
    %273 = vmatpush1.msra.mxu0 0.0
    %274 = vmatprep.subr.mxu0 0.0
    %275 = vmatpush1.msra.mxu0 0.0
    %276 = vmatprep.subr.mxu0 0.0
    %277 = vmatpush1.msra.mxu0 0.0
    %278 = vmatprep.subr.mxu0 0.0
    %279 = vmatpush1.msra.mxu0 0.0
    %280 = vmatprep.mubr.f32.mxu0 0.0
    %281 = vmatmul.mubr.f32.gmra.mrb[0].mxu0 %v215
    %v282 = vpop.f32.mrb[0].mxu0
    %v283 = vadd.f32 0.0, %v282
    %v284 = vpop.f32.mrb[0].mxu0
    %285 = vdwg.mxu0
    %vm286 = vcmp.lt.s32.totalorder %v56, 97
    %v287 = vmul.f32 %v283, 0.5
    %v288 = vtanh.pop %v287
    %v289 = vmul.f32 %v288, 0.5
    %v290 = vadd.f32 %v289, 0.5
    %v291 = vsel %vm286, 1, 0
    %vm292 = vcmp.eq.s32.totalorder %v291, 1
    %v293 = vsel %vm292, %v290, 0.0
    %v294 = vsel %vm61, 1, 0
    %vm295 = vcmp.eq.s32.totalorder %v294, 1
    %v296 = vsel %vm295, %v215, %v293
    %v297 = vsel %vm58, 1, 0
    %vm298 = vcmp.eq.s32.totalorder %v297, 1
    %v299 = vsel %vm298, %v140, %v296
    %300 = vst [vmem:[#allocation7] sm:$0xff] %v299
    // Predicated region
    $region18: #{tpu_custom_call.1} parent=1 // pred_check
      _
    $region19: #{tpu_custom_call.1} parent=1 // pred_check_branch
      %302 = sbr.rel (0) target = $region21
    $region20: #{tpu_custom_call.1} parent=1 // pred_region
      %s304 = ssub.s32 128, 128
      %305 = vsyncadd [#allocation4], %s304
      %s307 = sshll.u32 [#allocation7], 4
      %s308 = int_to_ptr.vmem [resolvable:$true] %s307
      %310 = dma.vmem_to_hbm [thread:$0]  %s308, 128, %s2, [#allocation4]
    $region21: #{tpu_custom_call.1} parent=1 // pred_fallthru
      _
    // Predicated region
    $region22: #{tpu_custom_call.1} parent=1 // pred_check
      _
    $region23: #{tpu_custom_call.1} parent=1 // pred_check_branch
      %312 = sbr.rel (0) target = $region25
    $region24: #{tpu_custom_call.1} parent=1 // pred_region
      %313 = dma.done [#allocation4], 128
    $region25: #{tpu_custom_call.1} parent=1 // pred_fallthru
      _
    %314 = vsyncpa [#allocation3], 1
    %315 = vsyncpa [#allocation6], 1
    %316 = vsyncpa [#allocation4], 1

</llo_original>
